<compile_context>
chip_gen: v6e
topology: v6e:2x2x1
jax: 0.10.0
libtpu: 0.0.40
codegen_flags: <defaults>
</compile_context>

<pallas_src>
import functools

import jax
import jax.numpy as jnp
from jax.experimental import pallas as pl
from jax.experimental.pallas import tpu as pltpu

# ------------------------- config (small, consistent with the module) -------
B = 8                           # batch
IN_SHAPE = 16                   # base input features
HIDDEN_SHAPES = (32, 32)        # base MLP hidden layers (ReLU after each)
APPEND_HIDDEN_SHAPES = (32,)    # append_fcs (ReLU after each)
OUTPUT_SHAPE = 6                # `last` Linear output
NORM = 1.0                      # self.norm scale
EPS = 1e-12                     # F.normalize eps
BATCH_TILE = 256                # rows per grid step if batch ever grows


def _layer_dims():
    dims = (IN_SHAPE,) + HIDDEN_SHAPES + APPEND_HIDDEN_SHAPES + (OUTPUT_SHAPE,)
    # ReLU after every layer except the final `last` Linear.
    relu_flags = [True] * (len(dims) - 2) + [False]
    return dims, relu_flags


# ------------------------- fused Pallas kernel ------------------------------
def _normnet_kernel(*refs, num_layers, relu_flags, norm_scale):
    """refs = (x_ref, w0, b0, w1, b1, ..., out_ref). Entire forward in VMEM."""
    x_ref = refs[0]
    out_ref = refs[-1]
    wb = refs[1:-1]

    h = x_ref[...]
    for i in range(num_layers):
        w = wb[2 * i][...]
        b = wb[2 * i + 1][...]
        # One MXU matmul per layer, f32 accumulation; bias broadcast on VPU.
        h = jnp.dot(h, w, preferred_element_type=jnp.float32) + b
        if relu_flags[i]:
            h = jnp.maximum(h, 0.0)

    # F.normalize: h / max(||h||_2, eps), then * norm.
    # rsqrt lowers to the EUP (its own bundle slot -> effectively free).
    ss = jnp.sum(h * h, axis=-1, keepdims=True)
    inv = jax.lax.rsqrt(jnp.maximum(ss, EPS * EPS))
    out_ref[...] = (h * (inv * norm_scale)).astype(out_ref.dtype)


def normnet_forward(params, x, *, batch_tile=BATCH_TILE, norm_scale=NORM):
    dims, relu_flags = _layer_dims()
    num_layers = len(params)
    bsz, in_dim = x.shape
    out_dim = params[-1][0].shape[1]

    tb = min(batch_tile, bsz)
    grid = (pl.cdiv(bsz, tb),)

    # Input specs: batch-tiled x; every weight/bias is a full-array block whose
    # block index is constant across the grid -> loaded once, VMEM-resident.
    in_specs = [pl.BlockSpec((tb, in_dim), lambda i: (i, 0))]
    flat_args = [x]
    for (w, b) in params:
        in_specs.append(pl.BlockSpec(w.shape, lambda i: (0, 0)))
        in_specs.append(pl.BlockSpec(b.shape, lambda i: (0, 0)))
        flat_args.append(w)
        flat_args.append(b)
    out_specs = pl.BlockSpec((tb, out_dim), lambda i: (i, 0))

    flops = 2 * bsz * sum(dims[i] * dims[i + 1] for i in range(len(dims) - 1))
    bytes_accessed = 4 * (x.size + bsz * out_dim
                          + sum(w.size + b.size for w, b in params))

    kernel = functools.partial(
        _normnet_kernel,
        num_layers=num_layers,
        relu_flags=tuple(relu_flags),
        norm_scale=norm_scale,
    )

    return pl.pallas_call(
        kernel,
        grid=grid,
        in_specs=in_specs,
        out_specs=out_specs,
        out_shape=jax.ShapeDtypeStruct((bsz, out_dim), jnp.float32),
        compiler_params=pltpu.CompilerParams(
            dimension_semantics=("parallel",)),
        cost_estimate=pl.CostEstimate(
            flops=flops, transcendentals=bsz, bytes_accessed=bytes_accessed),
    )(*flat_args)


# ------------------------- parameters ---------------------------------------
def init_params(key):
    dims, _ = _layer_dims()
    params = []
    keys = jax.random.split(key, len(dims) - 1)
    for k, din, dout in zip(keys, dims[:-1], dims[1:]):
        kw, kb = jax.random.split(k)
        w = 0.1 * jax.random.normal(kw, (din, dout), jnp.float32)   # [in, out]
        b = 0.1 * jax.random.normal(kb, (1, dout), jnp.float32)
        params.append((w, b))
    return params


# ------------------------- plain-JAX reference ------------------------------
def forward_ref(params, x, norm_scale=NORM):
    _, relu_flags = _layer_dims()
    hp = jax.lax.Precision.HIGHEST
    h = x
    for (w, b), do_relu in zip(params, relu_flags):
        h = jnp.dot(h, w, precision=hp) + b
        if do_relu:
            h = jnp.maximum(h, 0.0)
    n = jnp.sqrt(jnp.sum(h * h, axis=-1, keepdims=True))
    return norm_scale * h / jnp.maximum(n, EPS)


# ------------------------- main ----------------------------------------------
if __name__ == "__main__":
    key = jax.random.PRNGKey(0)
    kp, kx = jax.random.split(key)
    params = init_params(kp)
    x = jax.random.normal(kx, (B, IN_SHAPE), jnp.float32)

    out = jax.jit(normnet_forward)(params, x)
    out = jax.block_until_ready(out)
    assert out.shape == (B, OUTPUT_SHAPE), out.shape

    ref = forward_ref(params, x)
    max_err = float(jnp.max(jnp.abs(out - ref)))
    assert max_err < 1e-2, f"mismatch vs reference: {max_err}"

    print("KERNEL_OK")
</pallas_src>

<mosaic_0001>
module attributes {stable_mosaic.version = 11 : i64} {
  func.func @_normnet_kernel(%arg0: i32, %arg1: memref<8x16xf32, #tpu.memory_space<vmem>>, %arg2: memref<16x32xf32, #tpu.memory_space<vmem>>, %arg3: memref<1x32xf32, #tpu.memory_space<vmem>>, %arg4: memref<32x32xf32, #tpu.memory_space<vmem>>, %arg5: memref<1x32xf32, #tpu.memory_space<vmem>>, %arg6: memref<32x32xf32, #tpu.memory_space<vmem>>, %arg7: memref<1x32xf32, #tpu.memory_space<vmem>>, %arg8: memref<32x6xf32, #tpu.memory_space<vmem>>, %arg9: memref<1x6xf32, #tpu.memory_space<vmem>>, %arg10: memref<8x6xf32, #tpu.memory_space<vmem>>) attributes {dimension_semantics = [#tpu.dimension_semantics<parallel>], iteration_bounds = array<i64: 1>, scalar_prefetch = 0 : i64, scratch_operands = 0 : i64, tpu.core_type = #tpu.core_type<tc>, window_params = [{transform_indices = @transform_0, window_bounds = array<i64: 8, 16>}, {pipeline_mode = #tpu.pipeline_mode<synchronous>, transform_indices = @transform_1, window_bounds = array<i64: 16, 32>}, {pipeline_mode = #tpu.pipeline_mode<synchronous>, transform_indices = @transform_2, window_bounds = array<i64: 1, 32>}, {pipeline_mode = #tpu.pipeline_mode<synchronous>, transform_indices = @transform_3, window_bounds = array<i64: 32, 32>}, {pipeline_mode = #tpu.pipeline_mode<synchronous>, transform_indices = @transform_4, window_bounds = array<i64: 1, 32>}, {pipeline_mode = #tpu.pipeline_mode<synchronous>, transform_indices = @transform_5, window_bounds = array<i64: 32, 32>}, {pipeline_mode = #tpu.pipeline_mode<synchronous>, transform_indices = @transform_6, window_bounds = array<i64: 1, 32>}, {pipeline_mode = #tpu.pipeline_mode<synchronous>, transform_indices = @transform_7, window_bounds = array<i64: 32, 6>}, {pipeline_mode = #tpu.pipeline_mode<synchronous>, transform_indices = @transform_8, window_bounds = array<i64: 1, 6>}, {transform_indices = @transform_9, window_bounds = array<i64: 8, 6>}]} {
    %c0 = arith.constant 0 : index
    %c0_0 = arith.constant 0 : index
    %0 = vector.load %arg1[%c0, %c0_0] : memref<8x16xf32, #tpu.memory_space<vmem>>, vector<8x16xf32>
    %c0_1 = arith.constant 0 : index
    %c0_2 = arith.constant 0 : index
    %1 = vector.load %arg2[%c0_1, %c0_2] : memref<16x32xf32, #tpu.memory_space<vmem>>, vector<16x32xf32>
    %c0_3 = arith.constant 0 : index
    %c0_4 = arith.constant 0 : index
    %2 = vector.load %arg3[%c0_3, %c0_4] : memref<1x32xf32, #tpu.memory_space<vmem>>, vector<1x32xf32>
    %cst = arith.constant dense<0.000000e+00> : vector<8x32xf32>
    %3 = tpu.matmul %0, %1, %cst {dimension_numbers = #tpu.dot_dimension_numbers<[1], [0], [0], [1], [0, 0, 1, 1], [], []>} : vector<8x16xf32>, vector<16x32xf32>, vector<8x32xf32> -> vector<8x32xf32>
    %4 = vector.broadcast %2 : vector<1x32xf32> to vector<8x32xf32>
    %5 = arith.addf %3, %4 : vector<8x32xf32>
    %cst_5 = arith.constant 0.000000e+00 : f32
    %6 = vector.broadcast %cst_5 : f32 to vector<8x32xf32>
    %7 = arith.maximumf %5, %6 : vector<8x32xf32>
    %c0_6 = arith.constant 0 : index
    %c0_7 = arith.constant 0 : index
    %8 = vector.load %arg4[%c0_6, %c0_7] : memref<32x32xf32, #tpu.memory_space<vmem>>, vector<32x32xf32>
    %c0_8 = arith.constant 0 : index
    %c0_9 = arith.constant 0 : index
    %9 = vector.load %arg5[%c0_8, %c0_9] : memref<1x32xf32, #tpu.memory_space<vmem>>, vector<1x32xf32>
    %cst_10 = arith.constant dense<0.000000e+00> : vector<8x32xf32>
    %10 = tpu.matmul %7, %8, %cst_10 {dimension_numbers = #tpu.dot_dimension_numbers<[1], [0], [0], [1], [0, 0, 1, 1], [], []>} : vector<8x32xf32>, vector<32x32xf32>, vector<8x32xf32> -> vector<8x32xf32>
    %11 = vector.broadcast %9 : vector<1x32xf32> to vector<8x32xf32>
    %12 = arith.addf %10, %11 : vector<8x32xf32>
    %cst_11 = arith.constant 0.000000e+00 : f32
    %13 = vector.broadcast %cst_11 : f32 to vector<8x32xf32>
    %14 = arith.maximumf %12, %13 : vector<8x32xf32>
    %c0_12 = arith.constant 0 : index
    %c0_13 = arith.constant 0 : index
    %15 = vector.load %arg6[%c0_12, %c0_13] : memref<32x32xf32, #tpu.memory_space<vmem>>, vector<32x32xf32>
    %c0_14 = arith.constant 0 : index
    %c0_15 = arith.constant 0 : index
    %16 = vector.load %arg7[%c0_14, %c0_15] : memref<1x32xf32, #tpu.memory_space<vmem>>, vector<1x32xf32>
    %cst_16 = arith.constant dense<0.000000e+00> : vector<8x32xf32>
    %17 = tpu.matmul %14, %15, %cst_16 {dimension_numbers = #tpu.dot_dimension_numbers<[1], [0], [0], [1], [0, 0, 1, 1], [], []>} : vector<8x32xf32>, vector<32x32xf32>, vector<8x32xf32> -> vector<8x32xf32>
    %18 = vector.broadcast %16 : vector<1x32xf32> to vector<8x32xf32>
    %19 = arith.addf %17, %18 : vector<8x32xf32>
    %cst_17 = arith.constant 0.000000e+00 : f32
    %20 = vector.broadcast %cst_17 : f32 to vector<8x32xf32>
    %21 = arith.maximumf %19, %20 : vector<8x32xf32>
    %c0_18 = arith.constant 0 : index
    %c0_19 = arith.constant 0 : index
    %22 = vector.load %arg8[%c0_18, %c0_19] : memref<32x6xf32, #tpu.memory_space<vmem>>, vector<32x6xf32>
    %c0_20 = arith.constant 0 : index
    %c0_21 = arith.constant 0 : index
    %23 = vector.load %arg9[%c0_20, %c0_21] : memref<1x6xf32, #tpu.memory_space<vmem>>, vector<1x6xf32>
    %cst_22 = arith.constant dense<0.000000e+00> : vector<8x6xf32>
    %24 = tpu.matmul %21, %22, %cst_22 {dimension_numbers = #tpu.dot_dimension_numbers<[1], [0], [0], [1], [0, 0, 1, 1], [], []>} : vector<8x32xf32>, vector<32x6xf32>, vector<8x6xf32> -> vector<8x6xf32>
    %25 = vector.broadcast %23 : vector<1x6xf32> to vector<8x6xf32>
    %26 = arith.addf %24, %25 : vector<8x6xf32>
    %27 = arith.mulf %26, %26 : vector<8x6xf32>
    %cst_23 = arith.constant dense<0.000000e+00> : vector<8xf32>
    %28 = vector.multi_reduction <add>, %27, %cst_23 [1] : vector<8x6xf32> to vector<8xf32>
    %29 = vector.shape_cast %28 : vector<8xf32> to vector<8x1xf32>
    %cst_24 = arith.constant 1.000000e-24 : f32
    %30 = vector.broadcast %cst_24 : f32 to vector<8x1xf32>
    %31 = arith.maximumf %29, %30 : vector<8x1xf32>
    %32 = math.rsqrt %31 : vector<8x1xf32>
    %cst_25 = arith.constant 1.000000e+00 : f32
    %33 = vector.broadcast %cst_25 : f32 to vector<8x1xf32>
    %34 = arith.mulf %32, %33 : vector<8x1xf32>
    %35 = vector.broadcast %34 : vector<8x1xf32> to vector<8x6xf32>
    %36 = arith.mulf %26, %35 : vector<8x6xf32>
    %c0_26 = arith.constant 0 : index
    %c0_27 = arith.constant 0 : index
    %37 = vector.load %arg10[%c0_26, %c0_27] : memref<8x6xf32, #tpu.memory_space<vmem>>, vector<8x6xf32>
    tpu.vector_store %arg10[%c0_26, %c0_27], %36 {strides = array<i32>} : memref<8x6xf32, #tpu.memory_space<vmem>>, vector<8x6xf32>,
    return
  }
  func.func @transform_0(%arg0: i32) -> (i32, i32) {
    %c0_i32 = arith.constant 0 : i32
    %c0_i32_0 = arith.constant 0 : i32
    return %arg0, %c0_i32 : i32, i32
  }
  func.func @transform_1(%arg0: i32) -> (i32, i32) {
    %c0_i32 = arith.constant 0 : i32
    %c0_i32_0 = arith.constant 0 : i32
    %c0_i32_1 = arith.constant 0 : i32
    return %c0_i32, %c0_i32_0 : i32, i32
  }
  func.func @transform_2(%arg0: i32) -> (i32, i32) {
    %c0_i32 = arith.constant 0 : i32
    %c0_i32_0 = arith.constant 0 : i32
    %c0_i32_1 = arith.constant 0 : i32
    return %c0_i32, %c0_i32_0 : i32, i32
  }
  func.func @transform_3(%arg0: i32) -> (i32, i32) {
    %c0_i32 = arith.constant 0 : i32
    %c0_i32_0 = arith.constant 0 : i32
    %c0_i32_1 = arith.constant 0 : i32
    return %c0_i32, %c0_i32_0 : i32, i32
  }
  func.func @transform_4(%arg0: i32) -> (i32, i32) {
    %c0_i32 = arith.constant 0 : i32
    %c0_i32_0 = arith.constant 0 : i32
    %c0_i32_1 = arith.constant 0 : i32
    return %c0_i32, %c0_i32_0 : i32, i32
  }
  func.func @transform_5(%arg0: i32) -> (i32, i32) {
    %c0_i32 = arith.constant 0 : i32
    %c0_i32_0 = arith.constant 0 : i32
    %c0_i32_1 = arith.constant 0 : i32
    return %c0_i32, %c0_i32_0 : i32, i32
  }
  func.func @transform_6(%arg0: i32) -> (i32, i32) {
    %c0_i32 = arith.constant 0 : i32
    %c0_i32_0 = arith.constant 0 : i32
    %c0_i32_1 = arith.constant 0 : i32
    return %c0_i32, %c0_i32_0 : i32, i32
  }
  func.func @transform_7(%arg0: i32) -> (i32, i32) {
    %c0_i32 = arith.constant 0 : i32
    %c0_i32_0 = arith.constant 0 : i32
    %c0_i32_1 = arith.constant 0 : i32
    return %c0_i32, %c0_i32_0 : i32, i32
  }
  func.func @transform_8(%arg0: i32) -> (i32, i32) {
    %c0_i32 = arith.constant 0 : i32
    %c0_i32_0 = arith.constant 0 : i32
    %c0_i32_1 = arith.constant 0 : i32
    return %c0_i32, %c0_i32_0 : i32, i32
  }
  func.func @transform_9(%arg0: i32) -> (i32, i32) {
    %c0_i32 = arith.constant 0 : i32
    %c0_i32_0 = arith.constant 0 : i32
    return %arg0, %c0_i32 : i32, i32
  }
}

</mosaic_0001>

<llo_original>
// kernel: normnet_forward.1
$region0: #{normnet_forward.1}
  #allocation0 [shape = 'u32[]', space=smem, size = 0x4, offset = 0x4, fixed_abs, tag = 'smem constant byte address 0x4 - core index']
  #allocation1 [shape = 'u32[144,128]{1,0:T(1,128)}', space=vmem, size = 0x12000, scoped, tag = 'internal scratch']
  %s0 = inlined_call_operand.vmem [shape: f32[8,16], index: 0, kind: input, shape index: {}]
  %s1 = inlined_call_operand.hbm [shape: f32[16,32], index: 1, kind: input, shape index: {}]
  %s2 = inlined_call_operand.vmem [shape: f32[1,32], index: 2, kind: input, shape index: {}]
  %s3 = inlined_call_operand.vmem [shape: f32[32,32], index: 3, kind: input, shape index: {}]
  %s4 = inlined_call_operand.vmem [shape: f32[1,32], index: 4, kind: input, shape index: {}]
  %s5 = inlined_call_operand.hbm [shape: f32[32,32], index: 5, kind: input, shape index: {}]
  %s6 = inlined_call_operand.hbm [shape: f32[1,32], index: 6, kind: input, shape index: {}]
  %s7 = inlined_call_operand.vmem [shape: f32[32,6], index: 7, kind: input, shape index: {}]
  %s8 = inlined_call_operand.vmem [shape: f32[1,6], index: 8, kind: input, shape index: {}]
  %s9 = inlined_call_operand.hbm [shape: f32[8,6], index: 9, kind: output, shape index: {}]
  %s10 = sld [smem:[#allocation0]]
  $region58: #{normnet_forward.1} parent=0
    _
  %s12 = ssub.s32 1, %s10
  %s13 = scalar_select 0, %s12, %s10
  $region1: #{normnet_forward.1} parent=0
    #allocation2 [shape = 'u8[8192]{0}', space=vmem, size = 0x2000, scoped, tag = 'input window, operand 1, single buffered']
    #allocation3 [shape = 's32[1]{0}', space=sflag, size = 0x4, scoped, tag = 'scoped memory for normnet_forward.1']
    #allocation4 [shape = 's32[1]{0}', space=sflag, size = 0x4, scoped, tag = 'scoped memory for normnet_forward.1']
    #allocation5 [shape = 'u8[16384]{0}', space=vmem, size = 0x4000, scoped, tag = 'input window, operand 5, single buffered']
    #allocation6 [shape = 's32[1]{0}', space=sflag, size = 0x4, scoped, tag = 'scoped memory for normnet_forward.1']
    #allocation7 [shape = 'u8[512]{0}', space=vmem, size = 0x400, scoped, tag = 'input window, operand 6, single buffered']
    #allocation8 [shape = 'u8[4096]{0}', space=vmem, size = 0x1000, scoped, tag = 'output window, operand 0, single buffered']
    %14 = vsyncpa [#allocation3], 0
    %15 = vsyncpa [#allocation6], 0
    %16 = vsyncpa [#allocation4], 0
    // Predicated region
    $region2: #{normnet_forward.1} parent=1 // pred_check
      _
    $region3: #{normnet_forward.1} parent=1 // pred_check_branch
      %18 = sbr.rel (0) target = $region5
    $region4: #{normnet_forward.1} parent=1 // pred_region
      _
    $region5: #{normnet_forward.1} parent=1 // pred_fallthru
      _
    // Predicated region
    $region6: #{normnet_forward.1} parent=1 // pred_check
      _
    $region7: #{normnet_forward.1} parent=1 // pred_check_branch
      %20 = sbr.rel (0) target = $region9
    $region8: #{normnet_forward.1} parent=1 // pred_region
      %s22 = ssub.s32 256, 256
      %23 = vsyncadd [#allocation3], %s22
      %s24 = sshll.u32 [#allocation2], 4
      %s25 = int_to_ptr.vmem [resolvable:$true] %s24
      %30 = dma.hbm_to_vmem [thread:$0]  %s1, 256, %s25, [#allocation3], 128, 128, 8
    $region9: #{normnet_forward.1} parent=1 // pred_fallthru
      _
    // Predicated region
    $region10: #{normnet_forward.1} parent=1 // pred_check
      _
    $region11: #{normnet_forward.1} parent=1 // pred_check_branch
      %32 = sbr.rel (0) target = $region13
    $region12: #{normnet_forward.1} parent=1 // pred_region
      _
    $region13: #{normnet_forward.1} parent=1 // pred_fallthru
      _
    // Predicated region
    $region14: #{normnet_forward.1} parent=1 // pred_check
      _
    $region15: #{normnet_forward.1} parent=1 // pred_check_branch
      %34 = sbr.rel (0) target = $region17
    $region16: #{normnet_forward.1} parent=1 // pred_region
      _
    $region17: #{normnet_forward.1} parent=1 // pred_fallthru
      _
    // Predicated region
    $region18: #{normnet_forward.1} parent=1 // pred_check
      _
    $region19: #{normnet_forward.1} parent=1 // pred_check_branch
      %36 = sbr.rel (0) target = $region21
    $region20: #{normnet_forward.1} parent=1 // pred_region
      _
    $region21: #{normnet_forward.1} parent=1 // pred_fallthru
      _
    // Predicated region
    $region22: #{normnet_forward.1} parent=1 // pred_check
      _
    $region23: #{normnet_forward.1} parent=1 // pred_check_branch
      %38 = sbr.rel (0) target = $region25
    $region24: #{normnet_forward.1} parent=1 // pred_region
      %s40 = ssub.s32 512, 512
      %41 = vsyncadd [#allocation6], %s40
      %s42 = sshll.u32 [#allocation5], 4
      %s43 = int_to_ptr.vmem [resolvable:$true] %s42
      %48 = dma.hbm_to_vmem [thread:$0]  %s5, 512, %s43, [#allocation6], 128, 128, 8
    $region25: #{normnet_forward.1} parent=1 // pred_fallthru
      _
    // Predicated region
    $region26: #{normnet_forward.1} parent=1 // pred_check
      _
    $region27: #{normnet_forward.1} parent=1 // pred_check_branch
      %50 = sbr.rel (0) target = $region29
    $region28: #{normnet_forward.1} parent=1 // pred_region
      %s52 = ssub.s32 16, 16
      %53 = vsyncadd [#allocation6], %s52
      %s55 = sshll.u32 [#allocation7], 4
      %s56 = int_to_ptr.vmem [resolvable:$true] %s55
      %58 = dma.hbm_to_vmem [thread:$0]  %s6, 16, %s56, [#allocation6]
    $region29: #{normnet_forward.1} parent=1 // pred_fallthru
      _
    // Predicated region
    $region30: #{normnet_forward.1} parent=1 // pred_check
      _
    $region31: #{normnet_forward.1} parent=1 // pred_check_branch
      %60 = sbr.rel (0) target = $region33
    $region32: #{normnet_forward.1} parent=1 // pred_region
      _
    $region33: #{normnet_forward.1} parent=1 // pred_fallthru
      _
    // Predicated region
    $region34: #{normnet_forward.1} parent=1 // pred_check
      _
    $region35: #{normnet_forward.1} parent=1 // pred_check_branch
      %62 = sbr.rel (0) target = $region37
    $region36: #{normnet_forward.1} parent=1 // pred_region
      _
    $region37: #{normnet_forward.1} parent=1 // pred_fallthru
      _
    // Predicated region
    $region38: #{normnet_forward.1} parent=1 // pred_check
      _
    $region39: #{normnet_forward.1} parent=1 // pred_check_branch
      %64 = sbr.rel (0) target = $region41
    $region40: #{normnet_forward.1} parent=1 // pred_region
      %65 = dma.done [#allocation3], 256
    $region41: #{normnet_forward.1} parent=1 // pred_fallthru
      _
    // Predicated region
    $region42: #{normnet_forward.1} parent=1 // pred_check
      _
    $region43: #{normnet_forward.1} parent=1 // pred_check_branch
      %67 = sbr.rel (0) target = $region45
    $region44: #{normnet_forward.1} parent=1 // pred_region
      %68 = dma.done [#allocation6], 512
    $region45: #{normnet_forward.1} parent=1 // pred_fallthru
      _
    // Predicated region
    $region46: #{normnet_forward.1} parent=1 // pred_check
      _
    $region47: #{normnet_forward.1} parent=1 // pred_check_branch
      %70 = sbr.rel (0) target = $region49
    $region48: #{normnet_forward.1} parent=1 // pred_region
      %71 = dma.done [#allocation6], 16
    $region49: #{normnet_forward.1} parent=1 // pred_fallthru
      _
    %v72 = vld [vmem:[%s0] sm:$0xff]
    %v73 = vld [vmem:[#allocation2] sm:$0xff]
    %v74 = vld [vmem:[#allocation2 + $0x8] sm:$0xff]
    %v75 = vld [vmem:[%s2] sm:$0x1]
    %v77 = vlaneseq
    %v78 = vshrl.u32 %v77, 7
    %v79 = vsub.s32 0, %v78
    %v80 = vrot.slane %v75, %v79
    %vm82 = vcmask 130048
    %v84 = vsel %vm82, %v72, 0
    %86 = vmatprep.subr.mxu0 0.0
    %87 = vmatpush1.msra.mxu0 0.0
    %88 = vmatprep.subr.mxu0 0.0
    %89 = vmatpush1.msra.mxu0 0.0
    %90 = vmatprep.subr.mxu0 0.0
    %91 = vmatpush1.msra.mxu0 0.0
    %92 = vmatprep.subr.mxu0 0.0
    %93 = vmatpush1.msra.mxu0 0.0
    %94 = vmatprep.subr.mxu0 0.0
    %95 = vmatpush1.msra.mxu0 0.0
    %96 = vmatprep.subr.mxu0 0.0
    %97 = vmatpush1.msra.mxu0 0.0
    %98 = vmatprep.subr.mxu0 0.0
    %99 = vmatpush1.msra.mxu0 0.0
    %100 = vmatprep.subr.mxu0 0.0
    %101 = vmatpush1.msra.mxu0 0.0
    %102 = vmatprep.subr.mxu0 0.0
    %103 = vmatpush1.msra.mxu0 0.0
    %104 = vmatprep.subr.mxu0 0.0
    %105 = vmatpush1.msra.mxu0 0.0
    %106 = vmatprep.subr.mxu0 0.0
    %107 = vmatpush1.msra.mxu0 0.0
    %108 = vmatprep.subr.mxu0 0.0
    %109 = vmatpush1.msra.mxu0 0.0
    %110 = vmatprep.subr.mxu0 0.0
    %111 = vmatpush1.msra.mxu0 0.0
    %112 = vmatprep.subr.mxu0 0.0
    %113 = vmatpush1.msra.mxu0 0.0
    %114 = vmatprep.subr.mxu0 0.0
    %115 = vmatpush1.msra.mxu0 %v74
    %116 = vmatprep.subr.mxu0 0.0
    %117 = vmatpush1.msra.mxu0 %v73
    %118 = vmatprep.subr.mxu0 0.0
    %119 = vmatpush2.msra.mxu0 0.0
    %120 = vmatprep.subr.mxu0 0.0
    %121 = vmatpush2.msra.mxu0 0.0
    %122 = vmatprep.subr.mxu0 0.0
    %123 = vmatpush2.msra.mxu0 0.0
    %124 = vmatprep.subr.mxu0 0.0
    %125 = vmatpush2.msra.mxu0 0.0
    %126 = vmatprep.subr.mxu0 0.0
    %127 = vmatpush2.msra.mxu0 0.0
    %128 = vmatprep.subr.mxu0 0.0
    %129 = vmatpush2.msra.mxu0 0.0
    %130 = vmatprep.subr.mxu0 0.0
    %131 = vmatpush2.msra.mxu0 0.0
    %132 = vmatprep.subr.mxu0 0.0
    %133 = vmatpush2.msra.mxu0 0.0
    %134 = vmatprep.subr.mxu0 0.0
    %135 = vmatpush2.msra.mxu0 0.0
    %136 = vmatprep.subr.mxu0 0.0
    %137 = vmatpush2.msra.mxu0 0.0
    %138 = vmatprep.subr.mxu0 0.0
    %139 = vmatpush2.msra.mxu0 0.0
    %140 = vmatprep.subr.mxu0 0.0
    %141 = vmatpush2.msra.mxu0 0.0
    %142 = vmatprep.subr.mxu0 0.0
    %143 = vmatpush2.msra.mxu0 0.0
    %144 = vmatprep.subr.mxu0 0.0
    %145 = vmatpush2.msra.mxu0 0.0
    %146 = vmatprep.subr.mxu0 0.0
    %147 = vmatpush2.msra.mxu0 0.0
    %148 = vmatprep.subr.mxu0 0.0
    %149 = vmatpush2.msra.mxu0 0.0
    %150 = vmatprep.mubr.f32.mxu0 0.0
    %151 = vmatmul.mubr.f32.gmra.mxu0 %v84
    %v152 = vpop.f32.mrf.mxu0
    %v153 = vadd.f32 %v80, %v152
    %v154 = vpop.f32.mrf.mxu0
    %155 = vdwg.mxu0
    %v156 = vmax.f32 %v153, 0.0
    %v157 = vld [vmem:[%s3] sm:$0xff]
    %v158 = vld [vmem:[%s3 + $0x8] sm:$0xff]
    %v159 = vld [vmem:[%s3 + $0x10] sm:$0xff]
    %v160 = vld [vmem:[%s3 + $0x18] sm:$0xff]
    %v161 = vld [vmem:[%s4] sm:$0x1]
    %v163 = vlaneseq
    %v164 = vshrl.u32 %v163, 7
    %v165 = vsub.s32 0, %v164
    %v166 = vrot.slane %v161, %v165
    %vm168 = vcmask 261120
    %v170 = vsel %vm168, %v156, 0
    %172 = vmatprep.subr.mxu0 0.0
    %173 = vmatpush1.msra.mxu0 0.0
    %174 = vmatprep.subr.mxu0 0.0
    %175 = vmatpush1.msra.mxu0 0.0
    %176 = vmatprep.subr.mxu0 0.0
    %177 = vmatpush1.msra.mxu0 0.0
    %178 = vmatprep.subr.mxu0 0.0
    %179 = vmatpush1.msra.mxu0 0.0
    %180 = vmatprep.subr.mxu0 0.0
    %181 = vmatpush1.msra.mxu0 0.0
    %182 = vmatprep.subr.mxu0 0.0
    %183 = vmatpush1.msra.mxu0 0.0
    %184 = vmatprep.subr.mxu0 0.0
    %185 = vmatpush1.msra.mxu0 0.0
    %186 = vmatprep.subr.mxu0 0.0
    %187 = vmatpush1.msra.mxu0 0.0
    %188 = vmatprep.subr.mxu0 0.0
    %189 = vmatpush1.msra.mxu0 0.0
    %190 = vmatprep.subr.mxu0 0.0
    %191 = vmatpush1.msra.mxu0 0.0
    %192 = vmatprep.subr.mxu0 0.0
    %193 = vmatpush1.msra.mxu0 0.0
    %194 = vmatprep.subr.mxu0 0.0
    %195 = vmatpush1.msra.mxu0 0.0
    %196 = vmatprep.subr.mxu0 0.0
    %197 = vmatpush1.msra.mxu0 %v160
    %198 = vmatprep.subr.mxu0 0.0
    %199 = vmatpush1.msra.mxu0 %v159
    %200 = vmatprep.subr.mxu0 0.0
    %201 = vmatpush1.msra.mxu0 %v158
    %202 = vmatprep.subr.mxu0 0.0
    %203 = vmatpush1.msra.mxu0 %v157
    %204 = vmatprep.subr.mxu0 0.0
    %205 = vmatpush2.msra.mxu0 0.0
    %206 = vmatprep.subr.mxu0 0.0
    %207 = vmatpush2.msra.mxu0 0.0
    %208 = vmatprep.subr.mxu0 0.0
    %209 = vmatpush2.msra.mxu0 0.0
    %210 = vmatprep.subr.mxu0 0.0
    %211 = vmatpush2.msra.mxu0 0.0
    %212 = vmatprep.subr.mxu0 0.0
    %213 = vmatpush2.msra.mxu0 0.0
    %214 = vmatprep.subr.mxu0 0.0
    %215 = vmatpush2.msra.mxu0 0.0
    %216 = vmatprep.subr.mxu0 0.0
    %217 = vmatpush2.msra.mxu0 0.0
    %218 = vmatprep.subr.mxu0 0.0
    %219 = vmatpush2.msra.mxu0 0.0
    %220 = vmatprep.subr.mxu0 0.0
    %221 = vmatpush2.msra.mxu0 0.0
    %222 = vmatprep.subr.mxu0 0.0
    %223 = vmatpush2.msra.mxu0 0.0
    %224 = vmatprep.subr.mxu0 0.0
    %225 = vmatpush2.msra.mxu0 0.0
    %226 = vmatprep.subr.mxu0 0.0
    %227 = vmatpush2.msra.mxu0 0.0
    %228 = vmatprep.subr.mxu0 0.0
    %229 = vmatpush2.msra.mxu0 0.0
    %230 = vmatprep.subr.mxu0 0.0
    %231 = vmatpush2.msra.mxu0 0.0
    %232 = vmatprep.subr.mxu0 0.0
    %233 = vmatpush2.msra.mxu0 0.0
    %234 = vmatprep.subr.mxu0 0.0
    %235 = vmatpush2.msra.mxu0 0.0
    %236 = vmatprep.mubr.f32.mxu0 0.0
    %237 = vmatmul.mubr.f32.gmra.mxu0 %v170
    %v238 = vpop.f32.mrf.mxu0
    %v239 = vadd.f32 %v166, %v238
    %v240 = vpop.f32.mrf.mxu0
    %241 = vdwg.mxu0
    %v242 = vmax.f32 %v239, 0.0
    %v243 = vld [vmem:[#allocation5] sm:$0xff]
    %v244 = vld [vmem:[#allocation5 + $0x8] sm:$0xff]
    %v245 = vld [vmem:[#allocation5 + $0x10] sm:$0xff]
    %v246 = vld [vmem:[#allocation5 + $0x18] sm:$0xff]
    %v247 = vld [vmem:[#allocation7] sm:$0x1]
    %v249 = vlaneseq
    %v250 = vshrl.u32 %v249, 7
    %v251 = vsub.s32 0, %v250
    %v252 = vrot.slane %v247, %v251
    %v255 = vsel %vm168, %v242, 0
    %257 = vmatprep.subr.mxu0 0.0
    %258 = vmatpush1.msra.mxu0 0.0
    %259 = vmatprep.subr.mxu0 0.0
    %260 = vmatpush1.msra.mxu0 0.0
    %261 = vmatprep.subr.mxu0 0.0
    %262 = vmatpush1.msra.mxu0 0.0
    %263 = vmatprep.subr.mxu0 0.0
    %264 = vmatpush1.msra.mxu0 0.0
    %265 = vmatprep.subr.mxu0 0.0
    %266 = vmatpush1.msra.mxu0 0.0
    %267 = vmatprep.subr.mxu0 0.0
    %268 = vmatpush1.msra.mxu0 0.0
    %269 = vmatprep.subr.mxu0 0.0
    %270 = vmatpush1.msra.mxu0 0.0
    %271 = vmatprep.subr.mxu0 0.0
    %272 = vmatpush1.msra.mxu0 0.0
    %273 = vmatprep.subr.mxu0 0.0
    %274 = vmatpush1.msra.mxu0 0.0
    %275 = vmatprep.subr.mxu0 0.0
    %276 = vmatpush1.msra.mxu0 0.0
    %277 = vmatprep.subr.mxu0 0.0
    %278 = vmatpush1.msra.mxu0 0.0
    %279 = vmatprep.subr.mxu0 0.0
    %280 = vmatpush1.msra.mxu0 0.0
    %281 = vmatprep.subr.mxu0 0.0
    %282 = vmatpush1.msra.mxu0 %v246
    %283 = vmatprep.subr.mxu0 0.0
    %284 = vmatpush1.msra.mxu0 %v245
    %285 = vmatprep.subr.mxu0 0.0
    %286 = vmatpush1.msra.mxu0 %v244
    %287 = vmatprep.subr.mxu0 0.0
    %288 = vmatpush1.msra.mxu0 %v243
    %289 = vmatprep.subr.mxu0 0.0
    %290 = vmatpush2.msra.mxu0 0.0
    %291 = vmatprep.subr.mxu0 0.0
    %292 = vmatpush2.msra.mxu0 0.0
    %293 = vmatprep.subr.mxu0 0.0
    %294 = vmatpush2.msra.mxu0 0.0
    %295 = vmatprep.subr.mxu0 0.0
    %296 = vmatpush2.msra.mxu0 0.0
    %297 = vmatprep.subr.mxu0 0.0
    %298 = vmatpush2.msra.mxu0 0.0
    %299 = vmatprep.subr.mxu0 0.0
    %300 = vmatpush2.msra.mxu0 0.0
    %301 = vmatprep.subr.mxu0 0.0
    %302 = vmatpush2.msra.mxu0 0.0
    %303 = vmatprep.subr.mxu0 0.0
    %304 = vmatpush2.msra.mxu0 0.0
    %305 = vmatprep.subr.mxu0 0.0
    %306 = vmatpush2.msra.mxu0 0.0
    %307 = vmatprep.subr.mxu0 0.0
    %308 = vmatpush2.msra.mxu0 0.0
    %309 = vmatprep.subr.mxu0 0.0
    %310 = vmatpush2.msra.mxu0 0.0
    %311 = vmatprep.subr.mxu0 0.0
    %312 = vmatpush2.msra.mxu0 0.0
    %313 = vmatprep.subr.mxu0 0.0
    %314 = vmatpush2.msra.mxu0 0.0
    %315 = vmatprep.subr.mxu0 0.0
    %316 = vmatpush2.msra.mxu0 0.0
    %317 = vmatprep.subr.mxu0 0.0
    %318 = vmatpush2.msra.mxu0 0.0
    %319 = vmatprep.subr.mxu0 0.0
    %320 = vmatpush2.msra.mxu0 0.0
    %321 = vmatprep.mubr.f32.mxu0 0.0
    %322 = vmatmul.mubr.f32.gmra.mxu0 %v255
    %v323 = vpop.f32.mrf.mxu0
    %v324 = vadd.f32 %v252, %v323
    %v325 = vpop.f32.mrf.mxu0
    %326 = vdwg.mxu0
    %v327 = vmax.f32 %v324, 0.0
    %v328 = vld [vmem:[%s7] sm:$0xff]
    %v329 = vld [vmem:[%s7 + $0x8] sm:$0xff]
    %v330 = vld [vmem:[%s7 + $0x10] sm:$0xff]
    %v331 = vld [vmem:[%s7 + $0x18] sm:$0xff]
    %v332 = vld [vmem:[%s8] sm:$0x1]
    %v334 = vlaneseq
    %v335 = vshrl.u32 %v334, 7
    %v336 = vsub.s32 0, %v335
    %v337 = vrot.slane %v332, %v336
    %v340 = vsel %vm168, %v327, 0
    %342 = vmatprep.subr.mxu0 0.0
    %343 = vmatpush1.msra.mxu0 0.0
    %344 = vmatprep.subr.mxu0 0.0
    %345 = vmatpush1.msra.mxu0 0.0
    %346 = vmatprep.subr.mxu0 0.0
    %347 = vmatpush1.msra.mxu0 0.0
    %348 = vmatprep.subr.mxu0 0.0
    %349 = vmatpush1.msra.mxu0 0.0
    %350 = vmatprep.subr.mxu0 0.0
    %351 = vmatpush1.msra.mxu0 0.0
    %352 = vmatprep.subr.mxu0 0.0
    %353 = vmatpush1.msra.mxu0 0.0
    %354 = vmatprep.subr.mxu0 0.0
    %355 = vmatpush1.msra.mxu0 0.0
    %356 = vmatprep.subr.mxu0 0.0
    %357 = vmatpush1.msra.mxu0 0.0
    %358 = vmatprep.subr.mxu0 0.0
    %359 = vmatpush1.msra.mxu0 0.0
    %360 = vmatprep.subr.mxu0 0.0
    %361 = vmatpush1.msra.mxu0 0.0
    %362 = vmatprep.subr.mxu0 0.0
    %363 = vmatpush1.msra.mxu0 0.0
    %364 = vmatprep.subr.mxu0 0.0
    %365 = vmatpush1.msra.mxu0 0.0
    %366 = vmatprep.subr.mxu0 0.0
    %367 = vmatpush1.msra.mxu0 %v331
    %368 = vmatprep.subr.mxu0 0.0
    %369 = vmatpush1.msra.mxu0 %v330
    %370 = vmatprep.subr.mxu0 0.0
    %371 = vmatpush1.msra.mxu0 %v329
    %372 = vmatprep.subr.mxu0 0.0
    %373 = vmatpush1.msra.mxu0 %v328
    %374 = vmatprep.subr.mxu0 0.0
    %375 = vmatpush2.msra.mxu0 0.0
    %376 = vmatprep.subr.mxu0 0.0
    %377 = vmatpush2.msra.mxu0 0.0
    %378 = vmatprep.subr.mxu0 0.0
    %379 = vmatpush2.msra.mxu0 0.0
    %380 = vmatprep.subr.mxu0 0.0
    %381 = vmatpush2.msra.mxu0 0.0
    %382 = vmatprep.subr.mxu0 0.0
    %383 = vmatpush2.msra.mxu0 0.0
    %384 = vmatprep.subr.mxu0 0.0
    %385 = vmatpush2.msra.mxu0 0.0
    %386 = vmatprep.subr.mxu0 0.0
    %387 = vmatpush2.msra.mxu0 0.0
    %388 = vmatprep.subr.mxu0 0.0
    %389 = vmatpush2.msra.mxu0 0.0
    %390 = vmatprep.subr.mxu0 0.0
    %391 = vmatpush2.msra.mxu0 0.0
    %392 = vmatprep.subr.mxu0 0.0
    %393 = vmatpush2.msra.mxu0 0.0
    %394 = vmatprep.subr.mxu0 0.0
    %395 = vmatpush2.msra.mxu0 0.0
    %396 = vmatprep.subr.mxu0 0.0
    %397 = vmatpush2.msra.mxu0 0.0
    %398 = vmatprep.subr.mxu0 0.0
    %399 = vmatpush2.msra.mxu0 0.0
    %400 = vmatprep.subr.mxu0 0.0
    %401 = vmatpush2.msra.mxu0 0.0
    %402 = vmatprep.subr.mxu0 0.0
    %403 = vmatpush2.msra.mxu0 0.0
    %404 = vmatprep.subr.mxu0 0.0
    %405 = vmatpush2.msra.mxu0 0.0
    %406 = vmatprep.mubr.f32.mxu0 0.0
    %407 = vmatmul.mubr.f32.gmra.mxu0 %v340
    %v408 = vpop.f32.mrf.mxu0
    %v409 = vadd.f32 %v337, %v408
    %v410 = vpop.f32.mrf.mxu0
    %411 = vdwg.mxu0
    %v412 = vmul.f32 %v409, %v409
    %vm413 = vcmask 48128
    %v414 = vsel %vm413, %v412, 0.0
    %415 = vadd.xlane.f32.xlu0 %v414
    %v416 = vpop.xlane.xlu0 %415
    %v417 = vmax.f32 %v416, 1e-24
    %v418 = vrsqrt.pop %v417
    %v419 = vmul.f32 %v409, %v418
    %420 = vst.msk [vmem:[#allocation8] sm:$0xff] %vm413, %v419
    // Predicated region
    $region50: #{normnet_forward.1} parent=1 // pred_check
      _
    $region51: #{normnet_forward.1} parent=1 // pred_check_branch
      %422 = sbr.rel (0) target = $region53
    $region52: #{normnet_forward.1} parent=1 // pred_region
      %s424 = ssub.s32 128, 128
      %425 = vsyncadd [#allocation4], %s424
      %s427 = sshll.u32 [#allocation8], 4
      %s428 = int_to_ptr.vmem [resolvable:$true] %s427
      %430 = dma.vmem_to_hbm [thread:$0]  %s428, 128, %s9, [#allocation4]
    $region53: #{normnet_forward.1} parent=1 // pred_fallthru
      _
    // Predicated region
    $region54: #{normnet_forward.1} parent=1 // pred_check
      _
    $region55: #{normnet_forward.1} parent=1 // pred_check_branch
      %432 = sbr.rel (0) target = $region57
    $region56: #{normnet_forward.1} parent=1 // pred_region
      %433 = dma.done [#allocation4], 128
    $region57: #{normnet_forward.1} parent=1 // pred_fallthru
      _
    %434 = vsyncpa [#allocation3], 1
    %435 = vsyncpa [#allocation6], 1
    %436 = vsyncpa [#allocation4], 1

</llo_original>
